<compile_context>
chip_gen: v7x
topology: tpu7x:2x2x1
jax: 0.10.0
libtpu: 0.0.40
codegen_flags: <defaults>
</compile_context>

<pallas_src>
import functools
import math

import jax
import jax.numpy as jnp
from jax.experimental import pallas as pl
from jax.experimental.pallas import tpu as pltpu


_LANES = 128


def _basic_norm_kernel(eps_ref, x_ref, o_ref, *, num_channels):
    """Row-wise BasicNorm over the last (lane) axis.  x_ref/o_ref: (tm, C)."""
    xf = x_ref[...].astype(jnp.float32)
    sum_sq = jnp.sum(xf * xf, axis=-1, keepdims=True)            # XLU lane reduce
    eps = jnp.exp(eps_ref[0])                                    # scalar, negligible
    scale = jax.lax.rsqrt(sum_sq * (1.0 / num_channels) + eps)   # EUP rsqrt (fold 1/C)
    o_ref[...] = (xf * scale).astype(o_ref.dtype)


def _basic_norm_packed_kernel(eps_ref, seg_ref, x_ref, o_ref, *, num_channels):
    """Lane-dense BasicNorm: each 128-lane row packs g = 128 // C original rows.

    The segmented (per group of C lanes) sum of squares is a single
    (tm,128) x (128,128) matmul against the precomputed block-diagonal ones
    matrix `seg_ref` (built once in the wrapper, resident in VMEM via a
    constant index_map), so every load/store stays full lane width and the
    reduction uses the otherwise idle MXU.
    """
    xf = x_ref[...].astype(jnp.float32)                          # (tm, 128)
    # TODO(synk): drop to Precision.HIGH (bf16_3x) once confirmed supported by
    # the Mosaic dot lowering; it halves MXU passes (only matters on v5e where
    # the f32 matmul is nearly co-critical with HBM). HIGHEST is known-good.
    sum_sq = jnp.dot(xf * xf, seg_ref[...],
                     preferred_element_type=jnp.float32,
                     precision=jax.lax.Precision.HIGHEST)        # (tm, 128), pre-broadcast
    eps = jnp.exp(eps_ref[0])
    scale = jax.lax.rsqrt(sum_sq * (1.0 / num_channels) + eps)
    o_ref[...] = (xf * scale).astype(o_ref.dtype)


def _tpu_generation_info():
    """Return (vmem_capacity_bytes, multi_tensorcore) with safe fallbacks."""
    vmem_bytes = 64 << 20            # conservative (v7x-sized) default
    multi_tc = False
    try:
        vmem_bytes = int(pltpu.get_tpu_info().vmem_capacity_bytes)
    except Exception:                # pragma: no cover - older jax / CPU trace
        pass
    try:
        kind = jax.devices()[0].device_kind.lower()
        multi_tc = "v7" in kind      # v7x-class parts have 2 TensorCores/chip
    except Exception:                # pragma: no cover
        pass
    return vmem_bytes, multi_tc


def _choose_tm(n_rows, n_cols, itemsize, *, vmem_bytes, multi_tc):
    """Row-tile size.  The budget counts double-buffered in/out at native width
    plus the f32 block temporaries the kernel body materializes (xf, xf*xf,
    broadcast scale), so bf16 inputs don't overshoot VMEM on 64 MiB parts."""
    align = max(8, 32 // max(1, itemsize))          # 8 f32 / 16 bf16 / 32 int8 sublanes
    row_bytes = max(1, n_cols) * (4 * itemsize + 12)
    # 128 MiB-VMEM single-TC parts (v5e/v6e): fewer, longer DMAs win.
    # 64 MiB-VMEM v7x: smaller budget, leave compiler headroom.
    tile_budget = (48 << 20) if vmem_bytes >= (96 << 20) else (20 << 20)
    tm = max(align, (tile_budget // row_bytes) // align * align)
    if multi_tc and n_rows >= 2 * align:
        # Megacore: give both TensorCores the same (even) number of tiles.
        steps = max(2, pl.cdiv(n_rows, tm))
        if steps % 2:
            steps += 1
        tm = min(tm, max(align, pl.cdiv(pl.cdiv(n_rows, steps), align) * align))
    if tm >= n_rows:
        tm = n_rows                                 # single full-extent block (layout-legal)
    return tm


def basic_norm(x: jax.Array, eps_log: jax.Array, channel_dim: int = -1,
               *, block_rows: int | None = None) -> jax.Array:
    """BasicNorm forward.  `eps_log` holds log(eps), shape (1,), float32."""
    ndim = x.ndim
    cd = channel_dim % ndim
    # TODO(synk): channel_dim != last axis pays a full XLA transpose both ways
    # (3x the HBM traffic of the norm itself); a sublane-reduction kernel
    # variant would remove both round trips.
    x_moved = x if cd == ndim - 1 else jnp.moveaxis(x, cd, -1)
    moved_shape = x_moved.shape
    C = moved_shape[-1]
    R = math.prod(moved_shape[:-1]) if len(moved_shape) > 1 else 1
    itemsize = jnp.dtype(x.dtype).itemsize

    vmem_bytes, multi_tc = _tpu_generation_info()

    # Lane-dense packing when C is a small divisor of 128 (e.g. 32 -> pack 4
    # rows per 128-wide vreg row) so every load/store is a full-width vst.
    g = _LANES // C if (C < _LANES and _LANES % C == 0) else 1
    use_packed = g > 1 and (R % g == 0)
    # TODO(synk): when R % g != 0, split off the <= g-1 remainder rows instead
    # of falling back to masked (C-of-128) stores for the whole tensor.
    if use_packed:
        Rk, Ck = R // g, _LANES
    else:
        Rk, Ck = R, C
    xk = x_moved.reshape(Rk, Ck)                    # pure metadata reshape (row-major)

    tm = block_rows if block_rows is not None else _choose_tm(
        Rk, Ck, itemsize, vmem_bytes=vmem_bytes, multi_tc=multi_tc)
    tm = min(tm, Rk)
    grid = pl.cdiv(Rk, tm)                          # partial last block -> OOB masking
    vmem_limit = min(96 << 20, max(48 << 20, (vmem_bytes * 3) // 4))

    cost = pl.CostEstimate(
        flops=int(3 * R * C + (2 * Rk * Ck * Ck if use_packed else 0)),
        transcendentals=int(Rk * (Ck if use_packed else 1) + grid),
        bytes_accessed=int(2 * R * C * itemsize + (Ck * Ck * 4 if use_packed else 0) + 4),
    )

    if use_packed:
        # Block-diagonal ones matrix built once (compile-time constant),
        # DMA'd once and kept resident in VMEM via the constant index_map.
        seg = jnp.kron(jnp.eye(g, dtype=jnp.float32),
                       jnp.ones((C, C), dtype=jnp.float32))      # (128, 128)
        kernel = functools.partial(_basic_norm_packed_kernel, num_channels=C)
        in_specs = [
            pl.BlockSpec(memory_space=pltpu.MemorySpace.SMEM),   # log-eps scalar
            pl.BlockSpec((_LANES, _LANES), lambda i: (0, 0)),    # seg, resident
            pl.BlockSpec((tm, Ck), lambda i: (i, 0)),            # x row tile
        ]
        args = (eps_log, seg, xk)
    else:
        kernel = functools.partial(_basic_norm_kernel, num_channels=C)
        in_specs = [
            pl.BlockSpec(memory_space=pltpu.MemorySpace.SMEM),   # log-eps scalar
            pl.BlockSpec((tm, Ck), lambda i: (i, 0)),            # x row tile
        ]
        args = (eps_log, xk)

    out = pl.pallas_call(
        kernel,
        out_shape=jax.ShapeDtypeStruct((Rk, Ck), x.dtype),
        grid=(grid,),
        in_specs=in_specs,
        out_specs=pl.BlockSpec((tm, Ck), lambda i: (i, 0)),
        compiler_params=pltpu.CompilerParams(
            dimension_semantics=("parallel",),
            vmem_limit_bytes=vmem_limit,
        ),
        cost_estimate=cost,
    )(*args)

    out = out.reshape(moved_shape)
    return out if cd == ndim - 1 else jnp.moveaxis(out, -1, cd)


def basic_norm_ref(x, eps_log, channel_dim=-1):
    """Pure-JAX reference matching the PyTorch module exactly."""
    scales = (jnp.mean(x.astype(jnp.float32) ** 2, axis=channel_dim, keepdims=True)
              + jnp.exp(eps_log[0])) ** (-0.5)
    return (x.astype(jnp.float32) * scales).astype(x.dtype)


if __name__ == "__main__":
    # Module config: num_channels=32, channel_dim=-1, eps=0.25, learn_eps=True.
    num_channels = 32
    eps_init = 0.25
    eps_log = jnp.array([math.log(eps_init)], dtype=jnp.float32)  # parameter stores log(eps)

    key = jax.random.PRNGKey(0)
    k1, k2, k3, k4 = jax.random.split(key, 4)

    # 1) (batch=2, seq=8, hidden=32): lane-dense packed path (g=4), single block.
    x1 = jax.random.normal(k1, (2, 8, num_channels), dtype=jnp.float32)
    y1 = jax.block_until_ready(basic_norm(x1, eps_log, channel_dim=-1))
    r1 = basic_norm_ref(x1, eps_log, channel_dim=-1)
    assert y1.shape == x1.shape and y1.dtype == x1.dtype
    assert jnp.allclose(y1, r1, atol=2e-5, rtol=2e-5)

    # 2) (batch=2, seq=32, hidden=256): plain wide-channel path.
    x2 = jax.random.normal(k2, (2, 32, 256), dtype=jnp.float32)
    y2 = jax.block_until_ready(basic_norm(x2, eps_log, channel_dim=-1))
    r2 = basic_norm_ref(x2, eps_log, channel_dim=-1)
    assert y2.shape == x2.shape and y2.dtype == x2.dtype
    assert jnp.allclose(y2, r2, atol=2e-5, rtol=2e-5)

    # 3) (batch=2, seq=32, hidden=64) with a forced small tile: packed path (g=2)
    #    with a multi-step grid, exercising the resident seg block across steps.
    x3 = jax.random.normal(k3, (2, 32, 64), dtype=jnp.float32)
    y3 = jax.block_until_ready(basic_norm(x3, eps_log, channel_dim=-1, block_rows=8))
    r3 = basic_norm_ref(x3, eps_log, channel_dim=-1)
    assert y3.shape == x3.shape and y3.dtype == x3.dtype
    assert jnp.allclose(y3, r3, atol=2e-5, rtol=2e-5)

    # 4) channel_dim=-2 (num_channels=32 on the middle axis): moveaxis wrapper path.
    x4 = jax.random.normal(k4, (2, num_channels, 8), dtype=jnp.float32)
    y4 = jax.block_until_ready(basic_norm(x4, eps_log, channel_dim=-2))
    r4 = basic_norm_ref(x4, eps_log, channel_dim=-2)
    assert y4.shape == x4.shape and y4.dtype == x4.dtype
    assert jnp.allclose(y4, r4, atol=2e-5, rtol=2e-5)

    # 5) bf16 input on the packed path (output dtype preserved).
    x5 = jax.random.normal(k1, (2, 8, num_channels), dtype=jnp.bfloat16)
    y5 = jax.block_until_ready(basic_norm(x5, eps_log, channel_dim=-1))
    r5 = basic_norm_ref(x5, eps_log, channel_dim=-1)
    assert y5.shape == x5.shape and y5.dtype == x5.dtype
    assert jnp.allclose(y5.astype(jnp.float32), r5.astype(jnp.float32), atol=1e-2, rtol=1e-2)

    print("KERNEL_OK")
</pallas_src>

<mosaic_0001>
module attributes {stable_mosaic.version = 11 : i64} {
  func.func @_basic_norm_packed_kernel(%arg0: i32, %arg1: memref<1xf32, #tpu.memory_space<smem>>, %arg2: memref<128x128xf32, #tpu.memory_space<vmem>>, %arg3: memref<4x128xf32, #tpu.memory_space<vmem>>, %arg4: memref<4x128xf32, #tpu.memory_space<vmem>>) attributes {dimension_semantics = [#tpu.dimension_semantics<parallel>], iteration_bounds = array<i64: 1>, scalar_prefetch = 0 : i64, scratch_operands = 0 : i64, tpu.core_type = #tpu.core_type<tc>, window_params = [{transform_indices = @transform_0, window_bounds = array<i64: 1>}, {pipeline_mode = #tpu.pipeline_mode<synchronous>, transform_indices = @transform_1, window_bounds = array<i64: 128, 128>}, {transform_indices = @transform_2, window_bounds = array<i64: 4, 128>}, {transform_indices = @transform_3, window_bounds = array<i64: 4, 128>}]} {
    %c0 = arith.constant 0 : index
    %c0_0 = arith.constant 0 : index
    %0 = vector.load %arg3[%c0, %c0_0] : memref<4x128xf32, #tpu.memory_space<vmem>>, vector<4x128xf32>
    %1 = arith.mulf %0, %0 : vector<4x128xf32>
    %c0_1 = arith.constant 0 : index
    %c0_2 = arith.constant 0 : index
    %2 = vector.load %arg2[%c0_1, %c0_2] : memref<128x128xf32, #tpu.memory_space<vmem>>, vector<128x128xf32>
    %cst = arith.constant dense<0.000000e+00> : vector<4x128xf32>
    %3 = tpu.matmul %1, %2, %cst {dimension_numbers = #tpu.dot_dimension_numbers<[1], [0], [0], [1], [0, 0, 1, 1], [], []>, precision = #tpu.contract_precision<fp32>} : vector<4x128xf32>, vector<128x128xf32>, vector<4x128xf32> -> vector<4x128xf32>
    %c0_3 = arith.constant 0 : index
    %4 = memref.load %arg1[%c0_3] : memref<1xf32, #tpu.memory_space<smem>>
    %5 = math.exp %4 : f32
    %cst_4 = arith.constant 3.125000e-02 : f32
    %6 = vector.broadcast %cst_4 : f32 to vector<4x128xf32>
    %7 = arith.mulf %3, %6 : vector<4x128xf32>
    %8 = vector.broadcast %5 : f32 to vector<4x128xf32>
    %9 = arith.addf %7, %8 : vector<4x128xf32>
    %10 = math.rsqrt %9 : vector<4x128xf32>
    %11 = arith.mulf %0, %10 : vector<4x128xf32>
    %c0_5 = arith.constant 0 : index
    %c0_6 = arith.constant 0 : index
    %12 = vector.load %arg4[%c0_5, %c0_6] : memref<4x128xf32, #tpu.memory_space<vmem>>, vector<4x128xf32>
    tpu.vector_store %arg4[%c0_5, %c0_6], %11 {strides = array<i32>} : memref<4x128xf32, #tpu.memory_space<vmem>>, vector<4x128xf32>,
    return
  }
  func.func @transform_0(%arg0: i32) -> i32 {
    %c0_i32 = arith.constant 0 : i32
    %c0_i32_0 = arith.constant 0 : i32
    return %c0_i32 : i32
  }
  func.func @transform_1(%arg0: i32) -> (i32, i32) {
    %c0_i32 = arith.constant 0 : i32
    %c0_i32_0 = arith.constant 0 : i32
    %c0_i32_1 = arith.constant 0 : i32
    return %c0_i32, %c0_i32_0 : i32, i32
  }
  func.func @transform_2(%arg0: i32) -> (i32, i32) {
    %c0_i32 = arith.constant 0 : i32
    %c0_i32_0 = arith.constant 0 : i32
    return %arg0, %c0_i32 : i32, i32
  }
  func.func @transform_3(%arg0: i32) -> (i32, i32) {
    %c0_i32 = arith.constant 0 : i32
    %c0_i32_0 = arith.constant 0 : i32
    return %arg0, %c0_i32 : i32, i32
  }
}

</mosaic_0001>

<llo_original>
// kernel: tpu_custom_call.1
$region0: #{tpu_custom_call.1}
  #allocation0 [shape = 'u32[]', space=smem, size = 0x4, offset = 0x4, fixed_abs, tag = 'smem constant byte address 0x4 - core index']
  #allocation1 [shape = 'u32[144,128]{1,0:T(1,128)}', space=vmem, size = 0x12000, scoped, tag = 'internal scratch']
  #allocation2 [shape = 'f32[1]{0:T(128)S(6)}', space=smem, size = 0x200, scoped, tag = 'scoped memory for tpu_custom_call.1']
  %s0 = inlined_call_operand.<no memory space> [shape: f32[1], index: 0, kind: input, shape index: {}]
  %s1 = inlined_call_operand.hbm [shape: f32[128,128], index: 1, kind: input, shape index: {}]
  %s2 = inlined_call_operand.vmem [shape: f32[4,128], index: 2, kind: input, shape index: {}]
  %s3 = inlined_call_operand.hbm [shape: f32[4,128], index: 3, kind: output, shape index: {}]
  %s4 = sld [smem:[#allocation0]]
  $region26: #{tpu_custom_call.1} parent=0
    _
  %s6 = ssub.s32 1, %s4
  %s7 = scalar_select 0, %s6, %s4
  %8 = sst [smem:[#allocation2]] %s0
  $region1: #{tpu_custom_call.1} parent=0
    #allocation3 [shape = 'u8[65536]{0}', space=vmem, size = 0x10000, scoped, tag = 'input window, operand 1, single buffered']
    #allocation4 [shape = 's32[1]{0}', space=sflag, size = 0x4, scoped, tag = 'scoped memory for tpu_custom_call.1']
    #allocation5 [shape = 's32[1]{0}', space=sflag, size = 0x4, scoped, tag = 'scoped memory for tpu_custom_call.1']
    #allocation6 [shape = 'u8[2048]{0}', space=vmem, size = 0x800, scoped, tag = 'output window, operand 0, single buffered']
    %9 = vsyncpa [#allocation4], 0
    %10 = vsyncpa [#allocation5], 0
    // Predicated region
    $region2: #{tpu_custom_call.1} parent=1 // pred_check
      _
    $region3: #{tpu_custom_call.1} parent=1 // pred_check_branch
      %12 = sbr.rel (0) target = $region5
    $region4: #{tpu_custom_call.1} parent=1 // pred_region
      _
    $region5: #{tpu_custom_call.1} parent=1 // pred_fallthru
      _
    // Predicated region
    $region6: #{tpu_custom_call.1} parent=1 // pred_check
      _
    $region7: #{tpu_custom_call.1} parent=1 // pred_check_branch
      %14 = sbr.rel (0) target = $region9
    $region8: #{tpu_custom_call.1} parent=1 // pred_region
      %s16 = ssub.s32 2048, 2048
      %17 = vsyncadd [#allocation4], %s16
      %s18 = sshll.u32 [#allocation3], 4
      %s19 = int_to_ptr.vmem [resolvable:$true] %s18
      %24 = dma.hbm_to_vmem [thread:$0]  %s1, 2048, %s19, [#allocation4], 128, 128, 8
    $region9: #{tpu_custom_call.1} parent=1 // pred_fallthru
      _
    // Predicated region
    $region10: #{tpu_custom_call.1} parent=1 // pred_check
      _
    $region11: #{tpu_custom_call.1} parent=1 // pred_check_branch
      %26 = sbr.rel (0) target = $region13
    $region12: #{tpu_custom_call.1} parent=1 // pred_region
      _
    $region13: #{tpu_custom_call.1} parent=1 // pred_fallthru
      _
    // Predicated region
    $region14: #{tpu_custom_call.1} parent=1 // pred_check
      _
    $region15: #{tpu_custom_call.1} parent=1 // pred_check_branch
      %28 = sbr.rel (0) target = $region17
    $region16: #{tpu_custom_call.1} parent=1 // pred_region
      %29 = dma.done [#allocation4], 2048
    $region17: #{tpu_custom_call.1} parent=1 // pred_fallthru
      _
    %v30 = vld [vmem:[%s2] sm:$0xf]
    %v31 = vmul.f32 %v30, %v30
    %v32 = vld [vmem:[#allocation3] sm:$0xff]
    %v33 = vld [vmem:[#allocation3 + $0x8] sm:$0xff]
    %v34 = vld [vmem:[#allocation3 + $0x10] sm:$0xff]
    %v35 = vld [vmem:[#allocation3 + $0x18] sm:$0xff]
    %v36 = vld [vmem:[#allocation3 + $0x20] sm:$0xff]
    %v37 = vld [vmem:[#allocation3 + $0x28] sm:$0xff]
    %v38 = vld [vmem:[#allocation3 + $0x30] sm:$0xff]
    %v39 = vld [vmem:[#allocation3 + $0x38] sm:$0xff]
    %v40 = vld [vmem:[#allocation3 + $0x40] sm:$0xff]
    %v41 = vld [vmem:[#allocation3 + $0x48] sm:$0xff]
    %v42 = vld [vmem:[#allocation3 + $0x50] sm:$0xff]
    %v43 = vld [vmem:[#allocation3 + $0x58] sm:$0xff]
    %v44 = vld [vmem:[#allocation3 + $0x60] sm:$0xff]
    %v45 = vld [vmem:[#allocation3 + $0x68] sm:$0xff]
    %v46 = vld [vmem:[#allocation3 + $0x70] sm:$0xff]
    %v47 = vld [vmem:[#allocation3 + $0x78] sm:$0xff]
    %48 = vmatprep.subr.mxu0 0.0
    %v49 = vand.u32 %v32, 4294901760
    %50 = vmatpush1.msra.mxu0 %v49
    %51 = vmatprep.subr.mxu0 0.0
    %v52 = vand.u32 %v33, 4294901760
    %53 = vmatpush1.msra.mxu0 %v52
    %54 = vmatprep.subr.mxu0 0.0
    %v55 = vand.u32 %v34, 4294901760
    %56 = vmatpush1.msra.mxu0 %v55
    %57 = vmatprep.subr.mxu0 0.0
    %v58 = vand.u32 %v35, 4294901760
    %59 = vmatpush1.msra.mxu0 %v58
    %60 = vmatprep.subr.mxu0 0.0
    %v61 = vand.u32 %v36, 4294901760
    %62 = vmatpush1.msra.mxu0 %v61
    %63 = vmatprep.subr.mxu0 0.0
    %v64 = vand.u32 %v37, 4294901760
    %65 = vmatpush1.msra.mxu0 %v64
    %66 = vmatprep.subr.mxu0 0.0
    %v67 = vand.u32 %v38, 4294901760
    %68 = vmatpush1.msra.mxu0 %v67
    %69 = vmatprep.subr.mxu0 0.0
    %v70 = vand.u32 %v39, 4294901760
    %71 = vmatpush1.msra.mxu0 %v70
    %72 = vmatprep.subr.mxu0 0.0
    %v73 = vand.u32 %v40, 4294901760
    %74 = vmatpush1.msra.mxu0 %v73
    %75 = vmatprep.subr.mxu0 0.0
    %v76 = vand.u32 %v41, 4294901760
    %77 = vmatpush1.msra.mxu0 %v76
    %78 = vmatprep.subr.mxu0 0.0
    %v79 = vand.u32 %v42, 4294901760
    %80 = vmatpush1.msra.mxu0 %v79
    %81 = vmatprep.subr.mxu0 0.0
    %v82 = vand.u32 %v43, 4294901760
    %83 = vmatpush1.msra.mxu0 %v82
    %84 = vmatprep.subr.mxu0 0.0
    %v85 = vand.u32 %v44, 4294901760
    %86 = vmatpush1.msra.mxu0 %v85
    %87 = vmatprep.subr.mxu0 0.0
    %v88 = vand.u32 %v45, 4294901760
    %89 = vmatpush1.msra.mxu0 %v88
    %90 = vmatprep.subr.mxu0 0.0
    %v91 = vand.u32 %v46, 4294901760
    %92 = vmatpush1.msra.mxu0 %v91
    %93 = vmatprep.subr.mxu0 0.0
    %v94 = vand.u32 %v47, 4294901760
    %95 = vmatpush1.msra.mxu0 %v94
    %96 = vmatprep.subr.mxu0 0.0
    %97 = vmatpush1.msra.mxu0 0.0
    %98 = vmatprep.subr.mxu0 0.0
    %99 = vmatpush1.msra.mxu0 0.0
    %100 = vmatprep.subr.mxu0 0.0
    %101 = vmatpush1.msra.mxu0 0.0
    %102 = vmatprep.subr.mxu0 0.0
    %103 = vmatpush1.msra.mxu0 0.0
    %104 = vmatprep.subr.mxu0 0.0
    %105 = vmatpush1.msra.mxu0 0.0
    %106 = vmatprep.subr.mxu0 0.0
    %107 = vmatpush1.msra.mxu0 0.0
    %108 = vmatprep.subr.mxu0 0.0
    %109 = vmatpush1.msra.mxu0 0.0
    %110 = vmatprep.subr.mxu0 0.0
    %111 = vmatpush1.msra.mxu0 0.0
    %112 = vmatprep.subr.mxu0 0.0
    %113 = vmatpush1.msra.mxu0 0.0
    %114 = vmatprep.subr.mxu0 0.0
    %115 = vmatpush1.msra.mxu0 0.0
    %116 = vmatprep.subr.mxu0 0.0
    %117 = vmatpush1.msra.mxu0 0.0
    %118 = vmatprep.subr.mxu0 0.0
    %119 = vmatpush1.msra.mxu0 0.0
    %120 = vmatprep.subr.mxu0 0.0
    %121 = vmatpush1.msra.mxu0 0.0
    %122 = vmatprep.subr.mxu0 0.0
    %123 = vmatpush1.msra.mxu0 0.0
    %124 = vmatprep.subr.mxu0 0.0
    %125 = vmatpush1.msra.mxu0 0.0
    %126 = vmatprep.subr.mxu0 0.0
    %127 = vmatpush1.msra.mxu0 0.0
    %128 = vmatprep.mubr.f32.mxu0 0.0
    %v129 = vand.u32 %v31, 4294901760
    %v130 = vsub.f32 %v31, %v129
    %v131 = vand.u32 %v130, 4294901760
    %v132 = vsub.f32 %v130, %v131
    %v133 = vand.u32 %v132, 4294901760
    %134 = vmatmul.mubr.f32.gmra.mrb[0].mxu0 %v133
    %v135 = vpop.f32.mrb[0].mxu0
    %v136 = vadd.f32 0.0, %v135
    %v137 = vpop.f32.mrb[0].mxu0
    %138 = vdwg.mxu0
    %139 = vmatprep.subr.mxu0 0.0
    %v140 = vand.u32 %v32, 4294901760
    %v141 = vsub.f32 %v32, %v140
    %v142 = vand.u32 %v141, 4294901760
    %v143 = vsub.f32 %v141, %v142
    %v144 = vand.u32 %v143, 4294901760
    %145 = vmatpush1.msra.mxu0 %v144
    %146 = vmatprep.subr.mxu0 0.0
    %v147 = vand.u32 %v33, 4294901760
    %v148 = vsub.f32 %v33, %v147
    %v149 = vand.u32 %v148, 4294901760
    %v150 = vsub.f32 %v148, %v149
    %v151 = vand.u32 %v150, 4294901760
    %152 = vmatpush1.msra.mxu0 %v151
    %153 = vmatprep.subr.mxu0 0.0
    %v154 = vand.u32 %v34, 4294901760
    %v155 = vsub.f32 %v34, %v154
    %v156 = vand.u32 %v155, 4294901760
    %v157 = vsub.f32 %v155, %v156
    %v158 = vand.u32 %v157, 4294901760
    %159 = vmatpush1.msra.mxu0 %v158
    %160 = vmatprep.subr.mxu0 0.0
    %v161 = vand.u32 %v35, 4294901760
    %v162 = vsub.f32 %v35, %v161
    %v163 = vand.u32 %v162, 4294901760
    %v164 = vsub.f32 %v162, %v163
    %v165 = vand.u32 %v164, 4294901760
    %166 = vmatpush1.msra.mxu0 %v165
    %167 = vmatprep.subr.mxu0 0.0
    %v168 = vand.u32 %v36, 4294901760
    %v169 = vsub.f32 %v36, %v168
    %v170 = vand.u32 %v169, 4294901760
    %v171 = vsub.f32 %v169, %v170
    %v172 = vand.u32 %v171, 4294901760
    %173 = vmatpush1.msra.mxu0 %v172
    %174 = vmatprep.subr.mxu0 0.0
    %v175 = vand.u32 %v37, 4294901760
    %v176 = vsub.f32 %v37, %v175
    %v177 = vand.u32 %v176, 4294901760
    %v178 = vsub.f32 %v176, %v177
    %v179 = vand.u32 %v178, 4294901760
    %180 = vmatpush1.msra.mxu0 %v179
    %181 = vmatprep.subr.mxu0 0.0
    %v182 = vand.u32 %v38, 4294901760
    %v183 = vsub.f32 %v38, %v182
    %v184 = vand.u32 %v183, 4294901760
    %v185 = vsub.f32 %v183, %v184
    %v186 = vand.u32 %v185, 4294901760
    %187 = vmatpush1.msra.mxu0 %v186
    %188 = vmatprep.subr.mxu0 0.0
    %v189 = vand.u32 %v39, 4294901760
    %v190 = vsub.f32 %v39, %v189
    %v191 = vand.u32 %v190, 4294901760
    %v192 = vsub.f32 %v190, %v191
    %v193 = vand.u32 %v192, 4294901760
    %194 = vmatpush1.msra.mxu0 %v193
    %195 = vmatprep.subr.mxu0 0.0
    %v196 = vand.u32 %v40, 4294901760
    %v197 = vsub.f32 %v40, %v196
    %v198 = vand.u32 %v197, 4294901760
    %v199 = vsub.f32 %v197, %v198
    %v200 = vand.u32 %v199, 4294901760
    %201 = vmatpush1.msra.mxu0 %v200
    %202 = vmatprep.subr.mxu0 0.0
    %v203 = vand.u32 %v41, 4294901760
    %v204 = vsub.f32 %v41, %v203
    %v205 = vand.u32 %v204, 4294901760
    %v206 = vsub.f32 %v204, %v205
    %v207 = vand.u32 %v206, 4294901760
    %208 = vmatpush1.msra.mxu0 %v207
    %209 = vmatprep.subr.mxu0 0.0
    %v210 = vand.u32 %v42, 4294901760
    %v211 = vsub.f32 %v42, %v210
    %v212 = vand.u32 %v211, 4294901760
    %v213 = vsub.f32 %v211, %v212
    %v214 = vand.u32 %v213, 4294901760
    %215 = vmatpush1.msra.mxu0 %v214
    %216 = vmatprep.subr.mxu0 0.0
    %v217 = vand.u32 %v43, 4294901760
    %v218 = vsub.f32 %v43, %v217
    %v219 = vand.u32 %v218, 4294901760
    %v220 = vsub.f32 %v218, %v219
    %v221 = vand.u32 %v220, 4294901760
    %222 = vmatpush1.msra.mxu0 %v221
    %223 = vmatprep.subr.mxu0 0.0
    %v224 = vand.u32 %v44, 4294901760
    %v225 = vsub.f32 %v44, %v224
    %v226 = vand.u32 %v225, 4294901760
    %v227 = vsub.f32 %v225, %v226
    %v228 = vand.u32 %v227, 4294901760
    %229 = vmatpush1.msra.mxu0 %v228
    %230 = vmatprep.subr.mxu0 0.0
    %v231 = vand.u32 %v45, 4294901760
    %v232 = vsub.f32 %v45, %v231
    %v233 = vand.u32 %v232, 4294901760
    %v234 = vsub.f32 %v232, %v233
    %v235 = vand.u32 %v234, 4294901760
    %236 = vmatpush1.msra.mxu0 %v235
    %237 = vmatprep.subr.mxu0 0.0
    %v238 = vand.u32 %v46, 4294901760
    %v239 = vsub.f32 %v46, %v238
    %v240 = vand.u32 %v239, 4294901760
    %v241 = vsub.f32 %v239, %v240
    %v242 = vand.u32 %v241, 4294901760
    %243 = vmatpush1.msra.mxu0 %v242
    %244 = vmatprep.subr.mxu0 0.0
    %v245 = vand.u32 %v47, 4294901760
    %v246 = vsub.f32 %v47, %v245
    %v247 = vand.u32 %v246, 4294901760
    %v248 = vsub.f32 %v246, %v247
    %v249 = vand.u32 %v248, 4294901760
    %250 = vmatpush1.msra.mxu0 %v249
    %251 = vmatprep.subr.mxu0 0.0
    %252 = vmatpush1.msra.mxu0 0.0
    %253 = vmatprep.subr.mxu0 0.0
    %254 = vmatpush1.msra.mxu0 0.0
    %255 = vmatprep.subr.mxu0 0.0
    %256 = vmatpush1.msra.mxu0 0.0
    %257 = vmatprep.subr.mxu0 0.0
    %258 = vmatpush1.msra.mxu0 0.0
    %259 = vmatprep.subr.mxu0 0.0
    %260 = vmatpush1.msra.mxu0 0.0
    %261 = vmatprep.subr.mxu0 0.0
    %262 = vmatpush1.msra.mxu0 0.0
    %263 = vmatprep.subr.mxu0 0.0
    %264 = vmatpush1.msra.mxu0 0.0
    %265 = vmatprep.subr.mxu0 0.0
    %266 = vmatpush1.msra.mxu0 0.0
    %267 = vmatprep.subr.mxu0 0.0
    %268 = vmatpush1.msra.mxu0 0.0
    %269 = vmatprep.subr.mxu0 0.0
    %270 = vmatpush1.msra.mxu0 0.0
    %271 = vmatprep.subr.mxu0 0.0
    %272 = vmatpush1.msra.mxu0 0.0
    %273 = vmatprep.subr.mxu0 0.0
    %274 = vmatpush1.msra.mxu0 0.0
    %275 = vmatprep.subr.mxu0 0.0
    %276 = vmatpush1.msra.mxu0 0.0
    %277 = vmatprep.subr.mxu0 0.0
    %278 = vmatpush1.msra.mxu0 0.0
    %279 = vmatprep.subr.mxu0 0.0
    %280 = vmatpush1.msra.mxu0 0.0
    %281 = vmatprep.subr.mxu0 0.0
    %282 = vmatpush1.msra.mxu0 0.0
    %283 = vmatprep.mubr.f32.mxu0 0.0
    %v284 = vand.u32 %v31, 4294901760
    %285 = vmatmul.mubr.f32.gmra.mrb[0].mxu0 %v284
    %v286 = vpop.f32.mrb[0].mxu0
    %v287 = vadd.f32 %v136, %v286
    %v288 = vpop.f32.mrb[0].mxu0
    %289 = vdwg.mxu0
    %290 = vmatprep.subr.mxu0 0.0
    %v291 = vand.u32 %v32, 4294901760
    %v292 = vsub.f32 %v32, %v291
    %293 = vmatpush1.msra.mxu0 %v292
    %294 = vmatprep.subr.mxu0 0.0
    %v295 = vand.u32 %v33, 4294901760
    %v296 = vsub.f32 %v33, %v295
    %297 = vmatpush1.msra.mxu0 %v296
    %298 = vmatprep.subr.mxu0 0.0
    %v299 = vand.u32 %v34, 4294901760
    %v300 = vsub.f32 %v34, %v299
    %301 = vmatpush1.msra.mxu0 %v300
    %302 = vmatprep.subr.mxu0 0.0
    %v303 = vand.u32 %v35, 4294901760
    %v304 = vsub.f32 %v35, %v303
    %305 = vmatpush1.msra.mxu0 %v304
    %306 = vmatprep.subr.mxu0 0.0
    %v307 = vand.u32 %v36, 4294901760
    %v308 = vsub.f32 %v36, %v307
    %309 = vmatpush1.msra.mxu0 %v308
    %310 = vmatprep.subr.mxu0 0.0
    %v311 = vand.u32 %v37, 4294901760
    %v312 = vsub.f32 %v37, %v311
    %313 = vmatpush1.msra.mxu0 %v312
    %314 = vmatprep.subr.mxu0 0.0
    %v315 = vand.u32 %v38, 4294901760
    %v316 = vsub.f32 %v38, %v315
    %317 = vmatpush1.msra.mxu0 %v316
    %318 = vmatprep.subr.mxu0 0.0
    %v319 = vand.u32 %v39, 4294901760
    %v320 = vsub.f32 %v39, %v319
    %321 = vmatpush1.msra.mxu0 %v320
    %322 = vmatprep.subr.mxu0 0.0
    %v323 = vand.u32 %v40, 4294901760
    %v324 = vsub.f32 %v40, %v323
    %325 = vmatpush1.msra.mxu0 %v324
    %326 = vmatprep.subr.mxu0 0.0
    %v327 = vand.u32 %v41, 4294901760
    %v328 = vsub.f32 %v41, %v327
    %329 = vmatpush1.msra.mxu0 %v328
    %330 = vmatprep.subr.mxu0 0.0
    %v331 = vand.u32 %v42, 4294901760
    %v332 = vsub.f32 %v42, %v331
    %333 = vmatpush1.msra.mxu0 %v332
    %334 = vmatprep.subr.mxu0 0.0
    %v335 = vand.u32 %v43, 4294901760
    %v336 = vsub.f32 %v43, %v335
    %337 = vmatpush1.msra.mxu0 %v336
    %338 = vmatprep.subr.mxu0 0.0
    %v339 = vand.u32 %v44, 4294901760
    %v340 = vsub.f32 %v44, %v339
    %341 = vmatpush1.msra.mxu0 %v340
    %342 = vmatprep.subr.mxu0 0.0
    %v343 = vand.u32 %v45, 4294901760
    %v344 = vsub.f32 %v45, %v343
    %345 = vmatpush1.msra.mxu0 %v344
    %346 = vmatprep.subr.mxu0 0.0
    %v347 = vand.u32 %v46, 4294901760
    %v348 = vsub.f32 %v46, %v347
    %349 = vmatpush1.msra.mxu0 %v348
    %350 = vmatprep.subr.mxu0 0.0
    %v351 = vand.u32 %v47, 4294901760
    %v352 = vsub.f32 %v47, %v351
    %353 = vmatpush1.msra.mxu0 %v352
    %354 = vmatprep.subr.mxu0 0.0
    %355 = vmatpush1.msra.mxu0 0.0
    %356 = vmatprep.subr.mxu0 0.0
    %357 = vmatpush1.msra.mxu0 0.0
    %358 = vmatprep.subr.mxu0 0.0
    %359 = vmatpush1.msra.mxu0 0.0
    %360 = vmatprep.subr.mxu0 0.0
    %361 = vmatpush1.msra.mxu0 0.0
    %362 = vmatprep.subr.mxu0 0.0
    %363 = vmatpush1.msra.mxu0 0.0
    %364 = vmatprep.subr.mxu0 0.0
    %365 = vmatpush1.msra.mxu0 0.0
    %366 = vmatprep.subr.mxu0 0.0
    %367 = vmatpush1.msra.mxu0 0.0
    %368 = vmatprep.subr.mxu0 0.0
    %369 = vmatpush1.msra.mxu0 0.0
    %370 = vmatprep.subr.mxu0 0.0
    %371 = vmatpush1.msra.mxu0 0.0
    %372 = vmatprep.subr.mxu0 0.0
    %373 = vmatpush1.msra.mxu0 0.0
    %374 = vmatprep.subr.mxu0 0.0
    %375 = vmatpush1.msra.mxu0 0.0
    %376 = vmatprep.subr.mxu0 0.0
    %377 = vmatpush1.msra.mxu0 0.0
    %378 = vmatprep.subr.mxu0 0.0
    %379 = vmatpush1.msra.mxu0 0.0
    %380 = vmatprep.subr.mxu0 0.0
    %381 = vmatpush1.msra.mxu0 0.0
    %382 = vmatprep.subr.mxu0 0.0
    %383 = vmatpush1.msra.mxu0 0.0
    %384 = vmatprep.subr.mxu0 0.0
    %385 = vmatpush1.msra.mxu0 0.0
    %386 = vmatprep.mubr.f32.mxu0 0.0
    %v387 = vand.u32 %v31, 4294901760
    %v388 = vsub.f32 %v31, %v387
    %389 = vmatmul.mubr.f32.gmra.mrb[0].mxu0 %v388
    %v390 = vpop.f32.mrb[0].mxu0
    %v391 = vadd.f32 %v287, %v390
    %v392 = vpop.f32.mrb[0].mxu0
    %393 = vdwg.mxu0
    %394 = vmatprep.subr.mxu0 0.0
    %v395 = vand.u32 %v32, 4294901760
    %396 = vmatpush1.msra.mxu0 %v395
    %397 = vmatprep.subr.mxu0 0.0
    %v398 = vand.u32 %v33, 4294901760
    %399 = vmatpush1.msra.mxu0 %v398
    %400 = vmatprep.subr.mxu0 0.0
    %v401 = vand.u32 %v34, 4294901760
    %402 = vmatpush1.msra.mxu0 %v401
    %403 = vmatprep.subr.mxu0 0.0
    %v404 = vand.u32 %v35, 4294901760
    %405 = vmatpush1.msra.mxu0 %v404
    %406 = vmatprep.subr.mxu0 0.0
    %v407 = vand.u32 %v36, 4294901760
    %408 = vmatpush1.msra.mxu0 %v407
    %409 = vmatprep.subr.mxu0 0.0
    %v410 = vand.u32 %v37, 4294901760
    %411 = vmatpush1.msra.mxu0 %v410
    %412 = vmatprep.subr.mxu0 0.0
    %v413 = vand.u32 %v38, 4294901760
    %414 = vmatpush1.msra.mxu0 %v413
    %415 = vmatprep.subr.mxu0 0.0
    %v416 = vand.u32 %v39, 4294901760
    %417 = vmatpush1.msra.mxu0 %v416
    %418 = vmatprep.subr.mxu0 0.0
    %v419 = vand.u32 %v40, 4294901760
    %420 = vmatpush1.msra.mxu0 %v419
    %421 = vmatprep.subr.mxu0 0.0
    %v422 = vand.u32 %v41, 4294901760
    %423 = vmatpush1.msra.mxu0 %v422
    %424 = vmatprep.subr.mxu0 0.0
    %v425 = vand.u32 %v42, 4294901760
    %426 = vmatpush1.msra.mxu0 %v425
    %427 = vmatprep.subr.mxu0 0.0
    %v428 = vand.u32 %v43, 4294901760
    %429 = vmatpush1.msra.mxu0 %v428
    %430 = vmatprep.subr.mxu0 0.0
    %v431 = vand.u32 %v44, 4294901760
    %432 = vmatpush1.msra.mxu0 %v431
    %433 = vmatprep.subr.mxu0 0.0
    %v434 = vand.u32 %v45, 4294901760
    %435 = vmatpush1.msra.mxu0 %v434
    %436 = vmatprep.subr.mxu0 0.0
    %v437 = vand.u32 %v46, 4294901760
    %438 = vmatpush1.msra.mxu0 %v437
    %439 = vmatprep.subr.mxu0 0.0
    %v440 = vand.u32 %v47, 4294901760
    %441 = vmatpush1.msra.mxu0 %v440
    %442 = vmatprep.subr.mxu0 0.0
    %443 = vmatpush1.msra.mxu0 0.0
    %444 = vmatprep.subr.mxu0 0.0
    %445 = vmatpush1.msra.mxu0 0.0
    %446 = vmatprep.subr.mxu0 0.0
    %447 = vmatpush1.msra.mxu0 0.0
    %448 = vmatprep.subr.mxu0 0.0
    %449 = vmatpush1.msra.mxu0 0.0
    %450 = vmatprep.subr.mxu0 0.0
    %451 = vmatpush1.msra.mxu0 0.0
    %452 = vmatprep.subr.mxu0 0.0
    %453 = vmatpush1.msra.mxu0 0.0
    %454 = vmatprep.subr.mxu0 0.0
    %455 = vmatpush1.msra.mxu0 0.0
    %456 = vmatprep.subr.mxu0 0.0
    %457 = vmatpush1.msra.mxu0 0.0
    %458 = vmatprep.subr.mxu0 0.0
    %459 = vmatpush1.msra.mxu0 0.0
    %460 = vmatprep.subr.mxu0 0.0
    %461 = vmatpush1.msra.mxu0 0.0
    %462 = vmatprep.subr.mxu0 0.0
    %463 = vmatpush1.msra.mxu0 0.0
    %464 = vmatprep.subr.mxu0 0.0
    %465 = vmatpush1.msra.mxu0 0.0
    %466 = vmatprep.subr.mxu0 0.0
    %467 = vmatpush1.msra.mxu0 0.0
    %468 = vmatprep.subr.mxu0 0.0
    %469 = vmatpush1.msra.mxu0 0.0
    %470 = vmatprep.subr.mxu0 0.0
    %471 = vmatpush1.msra.mxu0 0.0
    %472 = vmatprep.subr.mxu0 0.0
    %473 = vmatpush1.msra.mxu0 0.0
    %474 = vmatprep.mubr.f32.mxu0 0.0
    %v475 = vand.u32 %v31, 4294901760
    %v476 = vsub.f32 %v31, %v475
    %v477 = vand.u32 %v476, 4294901760
    %478 = vmatmul.mubr.f32.gmra.mrb[0].mxu0 %v477
    %v479 = vpop.f32.mrb[0].mxu0
    %v480 = vadd.f32 %v391, %v479
    %v481 = vpop.f32.mrb[0].mxu0
    %482 = vdwg.mxu0
    %483 = vmatprep.subr.mxu0 0.0
    %v484 = vand.u32 %v32, 4294901760
    %v485 = vsub.f32 %v32, %v484
    %v486 = vand.u32 %v485, 4294901760
    %487 = vmatpush1.msra.mxu0 %v486
    %488 = vmatprep.subr.mxu0 0.0
    %v489 = vand.u32 %v33, 4294901760
    %v490 = vsub.f32 %v33, %v489
    %v491 = vand.u32 %v490, 4294901760
    %492 = vmatpush1.msra.mxu0 %v491
    %493 = vmatprep.subr.mxu0 0.0
    %v494 = vand.u32 %v34, 4294901760
    %v495 = vsub.f32 %v34, %v494
    %v496 = vand.u32 %v495, 4294901760
    %497 = vmatpush1.msra.mxu0 %v496
    %498 = vmatprep.subr.mxu0 0.0
    %v499 = vand.u32 %v35, 4294901760
    %v500 = vsub.f32 %v35, %v499
    %v501 = vand.u32 %v500, 4294901760
    %502 = vmatpush1.msra.mxu0 %v501
    %503 = vmatprep.subr.mxu0 0.0
    %v504 = vand.u32 %v36, 4294901760
    %v505 = vsub.f32 %v36, %v504
    %v506 = vand.u32 %v505, 4294901760
    %507 = vmatpush1.msra.mxu0 %v506
    %508 = vmatprep.subr.mxu0 0.0
    %v509 = vand.u32 %v37, 4294901760
    %v510 = vsub.f32 %v37, %v509
    %v511 = vand.u32 %v510, 4294901760
    %512 = vmatpush1.msra.mxu0 %v511
    %513 = vmatprep.subr.mxu0 0.0
    %v514 = vand.u32 %v38, 4294901760
    %v515 = vsub.f32 %v38, %v514
    %v516 = vand.u32 %v515, 4294901760
    %517 = vmatpush1.msra.mxu0 %v516
    %518 = vmatprep.subr.mxu0 0.0
    %v519 = vand.u32 %v39, 4294901760
    %v520 = vsub.f32 %v39, %v519
    %v521 = vand.u32 %v520, 4294901760
    %522 = vmatpush1.msra.mxu0 %v521
    %523 = vmatprep.subr.mxu0 0.0
    %v524 = vand.u32 %v40, 4294901760
    %v525 = vsub.f32 %v40, %v524
    %v526 = vand.u32 %v525, 4294901760
    %527 = vmatpush1.msra.mxu0 %v526
    %528 = vmatprep.subr.mxu0 0.0
    %v529 = vand.u32 %v41, 4294901760
    %v530 = vsub.f32 %v41, %v529
    %v531 = vand.u32 %v530, 4294901760
    %532 = vmatpush1.msra.mxu0 %v531
    %533 = vmatprep.subr.mxu0 0.0
    %v534 = vand.u32 %v42, 4294901760
    %v535 = vsub.f32 %v42, %v534
    %v536 = vand.u32 %v535, 4294901760
    %537 = vmatpush1.msra.mxu0 %v536
    %538 = vmatprep.subr.mxu0 0.0
    %v539 = vand.u32 %v43, 4294901760
    %v540 = vsub.f32 %v43, %v539
    %v541 = vand.u32 %v540, 4294901760
    %542 = vmatpush1.msra.mxu0 %v541
    %543 = vmatprep.subr.mxu0 0.0
    %v544 = vand.u32 %v44, 4294901760
    %v545 = vsub.f32 %v44, %v544
    %v546 = vand.u32 %v545, 4294901760
    %547 = vmatpush1.msra.mxu0 %v546
    %548 = vmatprep.subr.mxu0 0.0
    %v549 = vand.u32 %v45, 4294901760
    %v550 = vsub.f32 %v45, %v549
    %v551 = vand.u32 %v550, 4294901760
    %552 = vmatpush1.msra.mxu0 %v551
    %553 = vmatprep.subr.mxu0 0.0
    %v554 = vand.u32 %v46, 4294901760
    %v555 = vsub.f32 %v46, %v554
    %v556 = vand.u32 %v555, 4294901760
    %557 = vmatpush1.msra.mxu0 %v556
    %558 = vmatprep.subr.mxu0 0.0
    %v559 = vand.u32 %v47, 4294901760
    %v560 = vsub.f32 %v47, %v559
    %v561 = vand.u32 %v560, 4294901760
    %562 = vmatpush1.msra.mxu0 %v561
    %563 = vmatprep.subr.mxu0 0.0
    %564 = vmatpush1.msra.mxu0 0.0
    %565 = vmatprep.subr.mxu0 0.0
    %566 = vmatpush1.msra.mxu0 0.0
    %567 = vmatprep.subr.mxu0 0.0
    %568 = vmatpush1.msra.mxu0 0.0
    %569 = vmatprep.subr.mxu0 0.0
    %570 = vmatpush1.msra.mxu0 0.0
    %571 = vmatprep.subr.mxu0 0.0
    %572 = vmatpush1.msra.mxu0 0.0
    %573 = vmatprep.subr.mxu0 0.0
    %574 = vmatpush1.msra.mxu0 0.0
    %575 = vmatprep.subr.mxu0 0.0
    %576 = vmatpush1.msra.mxu0 0.0
    %577 = vmatprep.subr.mxu0 0.0
    %578 = vmatpush1.msra.mxu0 0.0
    %579 = vmatprep.subr.mxu0 0.0
    %580 = vmatpush1.msra.mxu0 0.0
    %581 = vmatprep.subr.mxu0 0.0
    %582 = vmatpush1.msra.mxu0 0.0
    %583 = vmatprep.subr.mxu0 0.0
    %584 = vmatpush1.msra.mxu0 0.0
    %585 = vmatprep.subr.mxu0 0.0
    %586 = vmatpush1.msra.mxu0 0.0
    %587 = vmatprep.subr.mxu0 0.0
    %588 = vmatpush1.msra.mxu0 0.0
    %589 = vmatprep.subr.mxu0 0.0
    %590 = vmatpush1.msra.mxu0 0.0
    %591 = vmatprep.subr.mxu0 0.0
    %592 = vmatpush1.msra.mxu0 0.0
    %593 = vmatprep.subr.mxu0 0.0
    %594 = vmatpush1.msra.mxu0 0.0
    %595 = vmatprep.mubr.f32.mxu0 0.0
    %v596 = vand.u32 %v31, 4294901760
    %597 = vmatmul.mubr.f32.gmra.mrb[0].mxu0 %v596
    %v598 = vpop.f32.mrb[0].mxu0
    %v599 = vadd.f32 %v480, %v598
    %v600 = vpop.f32.mrb[0].mxu0
    %601 = vdwg.mxu0
    %602 = vmatprep.subr.mxu0 0.0
    %v603 = vand.u32 %v32, 4294901760
    %604 = vmatpush1.msra.mxu0 %v603
    %605 = vmatprep.subr.mxu0 0.0
    %v606 = vand.u32 %v33, 4294901760
    %607 = vmatpush1.msra.mxu0 %v606
    %608 = vmatprep.subr.mxu0 0.0
    %v609 = vand.u32 %v34, 4294901760
    %610 = vmatpush1.msra.mxu0 %v609
    %611 = vmatprep.subr.mxu0 0.0
    %v612 = vand.u32 %v35, 4294901760
    %613 = vmatpush1.msra.mxu0 %v612
    %614 = vmatprep.subr.mxu0 0.0
    %v615 = vand.u32 %v36, 4294901760
    %616 = vmatpush1.msra.mxu0 %v615
    %617 = vmatprep.subr.mxu0 0.0
    %v618 = vand.u32 %v37, 4294901760
    %619 = vmatpush1.msra.mxu0 %v618
    %620 = vmatprep.subr.mxu0 0.0
    %v621 = vand.u32 %v38, 4294901760
    %622 = vmatpush1.msra.mxu0 %v621
    %623 = vmatprep.subr.mxu0 0.0
    %v624 = vand.u32 %v39, 4294901760
    %625 = vmatpush1.msra.mxu0 %v624
    %626 = vmatprep.subr.mxu0 0.0
    %v627 = vand.u32 %v40, 4294901760
    %628 = vmatpush1.msra.mxu0 %v627
    %629 = vmatprep.subr.mxu0 0.0
    %v630 = vand.u32 %v41, 4294901760
    %631 = vmatpush1.msra.mxu0 %v630
    %632 = vmatprep.subr.mxu0 0.0
    %v633 = vand.u32 %v42, 4294901760
    %634 = vmatpush1.msra.mxu0 %v633
    %635 = vmatprep.subr.mxu0 0.0
    %v636 = vand.u32 %v43, 4294901760
    %637 = vmatpush1.msra.mxu0 %v636
    %638 = vmatprep.subr.mxu0 0.0
    %v639 = vand.u32 %v44, 4294901760
    %640 = vmatpush1.msra.mxu0 %v639
    %641 = vmatprep.subr.mxu0 0.0
    %v642 = vand.u32 %v45, 4294901760
    %643 = vmatpush1.msra.mxu0 %v642
    %644 = vmatprep.subr.mxu0 0.0
    %v645 = vand.u32 %v46, 4294901760
    %646 = vmatpush1.msra.mxu0 %v645
    %647 = vmatprep.subr.mxu0 0.0
    %v648 = vand.u32 %v47, 4294901760
    %649 = vmatpush1.msra.mxu0 %v648
    %650 = vmatprep.subr.mxu0 0.0
    %651 = vmatpush1.msra.mxu0 0.0
    %652 = vmatprep.subr.mxu0 0.0
    %653 = vmatpush1.msra.mxu0 0.0
    %654 = vmatprep.subr.mxu0 0.0
    %655 = vmatpush1.msra.mxu0 0.0
    %656 = vmatprep.subr.mxu0 0.0
    %657 = vmatpush1.msra.mxu0 0.0
    %658 = vmatprep.subr.mxu0 0.0
    %659 = vmatpush1.msra.mxu0 0.0
    %660 = vmatprep.subr.mxu0 0.0
    %661 = vmatpush1.msra.mxu0 0.0
    %662 = vmatprep.subr.mxu0 0.0
    %663 = vmatpush1.msra.mxu0 0.0
    %664 = vmatprep.subr.mxu0 0.0
    %665 = vmatpush1.msra.mxu0 0.0
    %666 = vmatprep.subr.mxu0 0.0
    %667 = vmatpush1.msra.mxu0 0.0
    %668 = vmatprep.subr.mxu0 0.0
    %669 = vmatpush1.msra.mxu0 0.0
    %670 = vmatprep.subr.mxu0 0.0
    %671 = vmatpush1.msra.mxu0 0.0
    %672 = vmatprep.subr.mxu0 0.0
    %673 = vmatpush1.msra.mxu0 0.0
    %674 = vmatprep.subr.mxu0 0.0
    %675 = vmatpush1.msra.mxu0 0.0
    %676 = vmatprep.subr.mxu0 0.0
    %677 = vmatpush1.msra.mxu0 0.0
    %678 = vmatprep.subr.mxu0 0.0
    %679 = vmatpush1.msra.mxu0 0.0
    %680 = vmatprep.subr.mxu0 0.0
    %681 = vmatpush1.msra.mxu0 0.0
    %682 = vmatprep.mubr.f32.mxu0 0.0
    %v683 = vand.u32 %v31, 4294901760
    %684 = vmatmul.mubr.f32.gmra.mrb[0].mxu0 %v683
    %v685 = vpop.f32.mrb[0].mxu0
    %v686 = vadd.f32 %v599, %v685
    %v687 = vpop.f32.mrb[0].mxu0
    %688 = vdwg.mxu0
    %s689 = sld [smem:[#allocation2]]
    %v690 = vstv %s689
    %v691 = vmul.f32 %v690, 1.442695
    %v692 = vpow.pop %v691
    %s693 = vtos %v692
    %v694 = vmul.f32 %v686, 0.03125
    %v695 = vstv %s693
    %v696 = vadd.f32 %v694, %v695
    %v697 = vrsqrt.pop %v696
    %v698 = vmul.f32 %v30, %v697
    %699 = vst [vmem:[#allocation6] sm:$0xf] %v698
    // Predicated region
    $region18: #{tpu_custom_call.1} parent=1 // pred_check
      _
    $region19: #{tpu_custom_call.1} parent=1 // pred_check_branch
      %701 = sbr.rel (0) target = $region21
    $region20: #{tpu_custom_call.1} parent=1 // pred_region
      %s703 = ssub.s32 64, 64
      %704 = vsyncadd [#allocation5], %s703
      %s706 = sshll.u32 [#allocation6], 4
      %s707 = int_to_ptr.vmem [resolvable:$true] %s706
      %709 = dma.vmem_to_hbm [thread:$0]  %s707, 64, %s3, [#allocation5]
    $region21: #{tpu_custom_call.1} parent=1 // pred_fallthru
      _
    // Predicated region
    $region22: #{tpu_custom_call.1} parent=1 // pred_check
      _
    $region23: #{tpu_custom_call.1} parent=1 // pred_check_branch
      %711 = sbr.rel (0) target = $region25
    $region24: #{tpu_custom_call.1} parent=1 // pred_region
      %712 = dma.done [#allocation5], 64
    $region25: #{tpu_custom_call.1} parent=1 // pred_fallthru
      _
    %713 = vsyncpa [#allocation4], 1
    %714 = vsyncpa [#allocation5], 1

</llo_original>
